<compile_context>
chip_gen: v7x
topology: tpu7x:2x2x1
jax: 0.10.0
libtpu: 0.0.40
codegen_flags: <defaults>
</compile_context>

<pallas_src>
import functools

import jax
import jax.numpy as jnp
from jax.experimental import pallas as pl
from jax.experimental.pallas import tpu as pltpu


def _ffn_kernel(x_ref, w13_ref, w2_ref, o_ref, acc_ref):
    # x_ref  : (tm, dim)      token tile (resident across the hidden axis)
    # w13_ref: (dim, 2*tn)    [W1^T chunk j | W3^T chunk j]
    # w2_ref : (tn, dim)      W2^T chunk j
    # o_ref  : (tm, dim)
    # acc_ref: (tm, dim) f32  accumulator scratch
    j = pl.program_id(1)

    @pl.when(j == 0)
    def _():
        acc_ref[...] = jnp.zeros_like(acc_ref)

    tn = w2_ref.shape[0]

    # One fused matmul for both gate and value projections of this chunk.
    h = jnp.dot(x_ref[...], w13_ref[...], preferred_element_type=jnp.float32)
    h1 = h[:, :tn]          # W1 chunk output
    h3 = h[:, tn:]          # W3 chunk output

    # SwiGLU gate in f32 (sigmoid goes to the EUP, mul to the VPU — both hide
    # under the MXU).
    gated = (h1 * jax.nn.sigmoid(h1)) * h3

    acc_ref[...] += jnp.dot(gated.astype(w2_ref.dtype), w2_ref[...],
                            preferred_element_type=jnp.float32)

    @pl.when(j == pl.num_programs(1) - 1)
    def _():
        o_ref[...] = acc_ref[...].astype(o_ref.dtype)


def prepare_ffn_weights(w1, w2, w3, *, tn=128):
    """One-time weight repack (do this at parameter-load time, NOT per call).

    w1, w3: (hidden, dim)  PyTorch nn.Linear layout (out, in)
    w2    : (dim, hidden)

    Returns:
      w13: (dim, 2*hidden), chunk-interleaved so that columns
           [j*2*tn, j*2*tn + tn)      == W1^T[:, j*tn:(j+1)*tn]
           [j*2*tn + tn, (j+1)*2*tn)  == W3^T[:, j*tn:(j+1)*tn]
      w2t: (hidden, dim)
    """
    hidden, dim = w1.shape
    assert hidden % tn == 0, "hidden must be divisible by the hidden tile tn"
    w1_c = w1.T.reshape(dim, hidden // tn, tn)
    w3_c = w3.T.reshape(dim, hidden // tn, tn)
    w13 = jnp.concatenate([w1_c, w3_c], axis=-1).reshape(dim, 2 * hidden)
    w2t = w2.T
    return w13, w2t


@functools.partial(jax.jit, static_argnames=("tm", "tn", "vmem_limit_bytes"))
def feed_forward(x, w13, w2t, *, tm=128, tn=128, vmem_limit_bytes=None):
    """x: (..., dim). w13: (dim, 2*hidden) chunk-interleaved; w2t: (hidden, dim)."""
    orig_shape = x.shape
    dim = orig_shape[-1]
    x2d = x.reshape(-1, dim)
    T = x2d.shape[0]
    hidden = w2t.shape[0]
    assert w13.shape == (dim, 2 * hidden)
    assert hidden % tn == 0, "hidden must be divisible by tn"

    # Pad the token count up to a multiple of tm (handles ragged / small T).
    n_tok_tiles = pl.cdiv(T, tm)
    T_pad = n_tok_tiles * tm
    if T_pad != T:
        x2d = jnp.pad(x2d, ((0, T_pad - T), (0, 0)))

    out = pl.pallas_call(
        _ffn_kernel,
        out_shape=jax.ShapeDtypeStruct((T_pad, dim), x.dtype),
        grid_spec=pltpu.PrefetchScalarGridSpec(
            num_scalar_prefetch=0,
            grid=(n_tok_tiles, hidden // tn),
            in_specs=[
                # x tile: constant across the hidden axis -> stays resident.
                pl.BlockSpec((tm, dim), lambda i, j: (i, 0)),
                # fused W1/W3 chunk j: streamed/double-buffered along j.
                pl.BlockSpec((dim, 2 * tn), lambda i, j: (0, j)),
                # W2 chunk j.
                pl.BlockSpec((tn, dim), lambda i, j: (j, 0)),
            ],
            out_specs=pl.BlockSpec((tm, dim), lambda i, j: (i, 0)),
            scratch_shapes=[pltpu.VMEM((tm, dim), jnp.float32)],
        ),
        compiler_params=pltpu.CompilerParams(
            dimension_semantics=("parallel", "arbitrary"),
            vmem_limit_bytes=vmem_limit_bytes,
        ),
    )(x2d, w13, w2t)

    if T_pad != T:
        out = out[:T]
    return out.reshape(orig_shape)


def _reference(x, w1, w2, w3):
    h1 = x @ w1.T
    h3 = x @ w3.T
    return (jax.nn.silu(h1) * h3) @ w2.T


if __name__ == "__main__":
    # Module config (matches the PyTorch __init__ semantics):
    dim = 128
    hidden_dim_in = 300
    multiple_of = 128
    ffn_dim_multiplier = None
    hidden_dim = hidden_dim_in
    if ffn_dim_multiplier is not None:
        hidden_dim = int(ffn_dim_multiplier * hidden_dim)
    hidden_dim = multiple_of * ((hidden_dim + multiple_of - 1) // multiple_of)  # -> 384

    batch, seq = 2, 64  # 128 tokens total

    key = jax.random.PRNGKey(0)
    kx, k1, k2, k3 = jax.random.split(key, 4)
    x = jax.random.normal(kx, (batch, seq, dim), dtype=jnp.float32)
    # PyTorch nn.Linear weight layout: (out_features, in_features)
    w1 = jax.random.normal(k1, (hidden_dim, dim), dtype=jnp.float32) * 0.02
    w2 = jax.random.normal(k2, (dim, hidden_dim), dtype=jnp.float32) * 0.02
    w3 = jax.random.normal(k3, (hidden_dim, dim), dtype=jnp.float32) * 0.02

    # One-time weight repack (transpose + W1/W3 fusion) outside the forward.
    tn = 128
    w13, w2t = prepare_ffn_weights(w1, w2, w3, tn=tn)
    w13 = jax.block_until_ready(w13)
    w2t = jax.block_until_ready(w2t)

    y = feed_forward(x, w13, w2t, tm=128, tn=tn)
    jax.block_until_ready(y)

    y_ref = _reference(x, w1, w2, w3)
    assert y.shape == x.shape
    assert jnp.allclose(y, y_ref, atol=2e-4, rtol=2e-4), "mismatch vs reference"

    print("KERNEL_OK")
</pallas_src>

<mosaic_0001>
module attributes {stable_mosaic.version = 11 : i64} {
  func.func @_ffn_kernel(%arg0: i32, %arg1: i32, %arg2: memref<128x128xf32, #tpu.memory_space<vmem>>, %arg3: memref<128x256xf32, #tpu.memory_space<vmem>>, %arg4: memref<128x128xf32, #tpu.memory_space<vmem>>, %arg5: memref<128x128xf32, #tpu.memory_space<vmem>>, %arg6: memref<128x128xf32, #tpu.memory_space<vmem>>) attributes {dimension_semantics = [#tpu.dimension_semantics<parallel>, #tpu.dimension_semantics<arbitrary>], iteration_bounds = array<i64: 1, 3>, scalar_prefetch = 0 : i64, scratch_operands = 1 : i64, tpu.core_type = #tpu.core_type<tc>, window_params = [{transform_indices = @transform_0, window_bounds = array<i64: 128, 128>}, {transform_indices = @transform_1, window_bounds = array<i64: 128, 256>}, {transform_indices = @transform_2, window_bounds = array<i64: 128, 128>}, {transform_indices = @transform_3, window_bounds = array<i64: 128, 128>}]} {
    %c0_i32 = arith.constant 0 : i32
    %0 = arith.cmpi eq, %arg1, %c0_i32 : i32
    %1 = arith.extui %0 : i1 to i32
    %c0_i32_0 = arith.constant 0 : i32
    %2 = arith.cmpi ne, %1, %c0_i32_0 : i32
    scf.if %2 {
      %cst_13 = arith.constant 0.000000e+00 : f32
      %23 = vector.broadcast %cst_13 : f32 to vector<128x128xf32>
      %c0_14 = arith.constant 0 : index
      %c0_15 = arith.constant 0 : index
      %24 = vector.load %arg6[%c0_14, %c0_15] : memref<128x128xf32, #tpu.memory_space<vmem>>, vector<128x128xf32>
      tpu.vector_store %arg6[%c0_14, %c0_15], %23 {strides = array<i32>} : memref<128x128xf32, #tpu.memory_space<vmem>>, vector<128x128xf32>,
    } else {
    }
    %c0 = arith.constant 0 : index
    %c0_1 = arith.constant 0 : index
    %3 = vector.load %arg2[%c0, %c0_1] : memref<128x128xf32, #tpu.memory_space<vmem>>, vector<128x128xf32>
    %c0_2 = arith.constant 0 : index
    %c0_3 = arith.constant 0 : index
    %4 = vector.load %arg3[%c0_2, %c0_3] : memref<128x256xf32, #tpu.memory_space<vmem>>, vector<128x256xf32>
    %cst = arith.constant dense<0.000000e+00> : vector<128x256xf32>
    %5 = tpu.matmul %3, %4, %cst {dimension_numbers = #tpu.dot_dimension_numbers<[1], [0], [0], [1], [0, 0, 1, 1], [], []>} : vector<128x128xf32>, vector<128x256xf32>, vector<128x256xf32> -> vector<128x256xf32>
    %6 = vector.extract_strided_slice %5 {offsets = [0, 0], sizes = [128, 128], strides = [1, 1]} : vector<128x256xf32> to vector<128x128xf32>
    %7 = vector.extract_strided_slice %5 {offsets = [0, 128], sizes = [128, 128], strides = [1, 1]} : vector<128x256xf32> to vector<128x128xf32>
    %8 = arith.negf %6 : vector<128x128xf32>
    %9 = math.exp %8 : vector<128x128xf32>
    %cst_4 = arith.constant 1.000000e+00 : f32
    %10 = vector.broadcast %cst_4 : f32 to vector<128x128xf32>
    %11 = arith.addf %10, %9 : vector<128x128xf32>
    %12 = arith.divf %10, %11 : vector<128x128xf32>
    %13 = arith.mulf %6, %12 : vector<128x128xf32>
    %14 = arith.mulf %13, %7 : vector<128x128xf32>
    %c0_5 = arith.constant 0 : index
    %c0_6 = arith.constant 0 : index
    %15 = vector.load %arg6[%c0_5, %c0_6] : memref<128x128xf32, #tpu.memory_space<vmem>>, vector<128x128xf32>
    %c0_7 = arith.constant 0 : index
    %c0_8 = arith.constant 0 : index
    %16 = vector.load %arg4[%c0_7, %c0_8] : memref<128x128xf32, #tpu.memory_space<vmem>>, vector<128x128xf32>
    %cst_9 = arith.constant dense<0.000000e+00> : vector<128x128xf32>
    %17 = tpu.matmul %14, %16, %cst_9 {dimension_numbers = #tpu.dot_dimension_numbers<[1], [0], [0], [1], [0, 0, 1, 1], [], []>} : vector<128x128xf32>, vector<128x128xf32>, vector<128x128xf32> -> vector<128x128xf32>
    %18 = arith.addf %15, %17 : vector<128x128xf32>
    %c0_10 = arith.constant 0 : index
    %c0_11 = arith.constant 0 : index
    %19 = vector.load %arg6[%c0_10, %c0_11] : memref<128x128xf32, #tpu.memory_space<vmem>>, vector<128x128xf32>
    tpu.vector_store %arg6[%c0_10, %c0_11], %18 {strides = array<i32>} : memref<128x128xf32, #tpu.memory_space<vmem>>, vector<128x128xf32>,
    %c2_i32 = arith.constant 2 : i32
    %20 = arith.cmpi eq, %arg1, %c2_i32 : i32
    %21 = arith.extui %20 : i1 to i32
    %c0_i32_12 = arith.constant 0 : i32
    %22 = arith.cmpi ne, %21, %c0_i32_12 : i32
    scf.if %22 {
      %c0_13 = arith.constant 0 : index
      %c0_14 = arith.constant 0 : index
      %23 = vector.load %arg6[%c0_13, %c0_14] : memref<128x128xf32, #tpu.memory_space<vmem>>, vector<128x128xf32>
      %c0_15 = arith.constant 0 : index
      %c0_16 = arith.constant 0 : index
      %24 = vector.load %arg5[%c0_15, %c0_16] : memref<128x128xf32, #tpu.memory_space<vmem>>, vector<128x128xf32>
      tpu.vector_store %arg5[%c0_15, %c0_16], %23 {strides = array<i32>} : memref<128x128xf32, #tpu.memory_space<vmem>>, vector<128x128xf32>,
    } else {
    }
    return
  }
  func.func @transform_0(%arg0: i32, %arg1: i32) -> (i32, i32) {
    %c0_i32 = arith.constant 0 : i32
    %c0_i32_0 = arith.constant 0 : i32
    return %arg0, %c0_i32 : i32, i32
  }
  func.func @transform_1(%arg0: i32, %arg1: i32) -> (i32, i32) {
    %c0_i32 = arith.constant 0 : i32
    %c0_i32_0 = arith.constant 0 : i32
    return %c0_i32, %arg1 : i32, i32
  }
  func.func @transform_2(%arg0: i32, %arg1: i32) -> (i32, i32) {
    %c0_i32 = arith.constant 0 : i32
    %c0_i32_0 = arith.constant 0 : i32
    return %arg1, %c0_i32 : i32, i32
  }
  func.func @transform_3(%arg0: i32, %arg1: i32) -> (i32, i32) {
    %c0_i32 = arith.constant 0 : i32
    %c0_i32_0 = arith.constant 0 : i32
    return %arg0, %c0_i32 : i32, i32
  }
}

</mosaic_0001>

<llo_original>
// kernel: feed_forward.1
$region0: #{feed_forward.1}
  #allocation0 [shape = 'u32[]', space=smem, size = 0x4, offset = 0x4, fixed_abs, tag = 'smem constant byte address 0x4 - core index']
  #allocation1 [shape = 'u32[144,128]{1,0:T(1,128)}', space=vmem, size = 0x12000, scoped, tag = 'internal scratch']
  #allocation2 [shape = 'f32[128,128]{1,0:T(8,128)}', space=vmem, size = 0x10000, scoped, tag = 'scratch operand']
  %s0 = inlined_call_operand.hbm [shape: f32[128,128], index: 0, kind: input, shape index: {}]
  %s1 = inlined_call_operand.hbm [shape: f32[128,768], index: 1, kind: input, shape index: {}]
  %s2 = inlined_call_operand.hbm [shape: f32[384,128], index: 2, kind: input, shape index: {}]
  %s3 = inlined_call_operand.hbm [shape: f32[128,128], index: 3, kind: output, shape index: {}]
  %s4 = sld [smem:[#allocation0]]
  $region65: #{feed_forward.1} parent=0
    _
  %s6 = ssub.s32 1, %s4
  %s7 = scalar_select 0, %s6, %s4
  $region1: #{feed_forward.1} parent=0
    #allocation3 [shape = 'u8[65536]{0}', space=vmem, size = 0x10000, scoped, tag = 'input window, operand 0, single buffered']
    #allocation4 [shape = 's32[2]{0}', space=sflag, size = 0x8, scoped, tag = 'scoped memory for feed_forward.1']
    #allocation5 [shape = 's32[2]{0}', space=sflag, size = 0x8, scoped, tag = 'scoped memory for feed_forward.1']
    #allocation6 [shape = 'u8[262144]{0}', space=vmem, size = 0x40000, scoped, tag = 'input window, operand 1']
    #allocation7 [shape = 's32[2]{0}', space=sflag, size = 0x8, scoped, tag = 'scoped memory for feed_forward.1']
    #allocation8 [shape = 'u8[131072]{0}', space=vmem, size = 0x20000, scoped, tag = 'input window, operand 2']
    #allocation9 [shape = 'u8[65536]{0}', space=vmem, size = 0x10000, scoped, tag = 'output window, operand 0, single buffered']
    %8 = vsyncpa [#allocation4], 0
    %9 = vsyncpa [#allocation7], 0
    %s10 = scalar_lea.sflag [#allocation7], 1
    %11 = vsyncpa %s10, 0
    %12 = vsyncpa [#allocation5], 0
    loop: start=0, step=1, limit=5
    $region2: #{feed_forward.1} parent=1 // loop_pre_header
      _
    $region3: #{feed_forward.1} parent=1 // loop_header
      %s14 = sphi 0, %s18
      %p15 = scmp.ge.s32.totalorder %s14, 5
      %s21 = sphi 0, %s33
      %s22 = sphi 0, %s29
      %s23 = sphi 0, %s21
      %s24 = sphi 0, %s22
      %s25 = sphi 0, %s23
      %s26 = sphi 0, %s24
      %s36 = sphi 0, %s38
      %s39 = sphi 0, %s36
      %s40 = sphi 0, %s39
      %s56 = sphi 0, %s40
      %s62 = sphi 0, %s64
      %s65 = sphi 0, %s62
      %s66 = sphi 0, %s65
      %s82 = sphi 0, %s66
      %s88 = sphi 0, %s90
      %s91 = sphi 0, %s88
      %s92 = sphi 0, %s91
      %s108 = sphi 0, %s92
      %s114 = sphi 0, %s116
      %s117 = sphi 0, %s114
      %s118 = sphi 0, %s117
      %s134 = sphi 0, %s118
    $region4: #{feed_forward.1} parent=1 // loop_header_branch
      %17 = sbr.rel (%p15) target = $region8
    $region5: #{feed_forward.1} parent=1 // loop_body
      %s19 = ssub.s32 %s14, 1
      %s20 = ssub.s32 %s14, 2
      %s27 = sadd.s32 1, %s22
      %p28 = scmp.ge.s32.totalorder %s27, 3
      %s29 = scalar_select %p28, 0, %s27
      %s30 = sadd.s32 1, %s21
      %s31 = scalar_select %p28, %s30, %s21
      %p32 = scmp.ge.s32.totalorder %s31, 1
      %s33 = scalar_select %p32, 0, %s31
      %s34 = ssub.s32 %s21, %s33
      %p35 = scmp.eq.s32.totalorder %s34, 0
      %s37 = sadd.s32 %s36, 1
      %s38 = scalar_select %p35, %s36, %s37
      %p41 = pneg %p35
      %p42 = scmp.eq.s32.totalorder %s14, 2
      %p43 = por %p41, %p42
      %p44 = scmp.ne.s32.totalorder %s36, %s39
      %p45 = scmp.eq.s32.totalorder %s14, 0
      %p46 = por %p44, %p45
      %p47 = scmp.ne.s32.totalorder %s36, %s39
      %p48 = scmp.eq.s32.totalorder %s19, 2
      %p49 = por %p47, %p48
      %p50 = scmp.ne.s32.totalorder %s39, %s40
      %p51 = scmp.eq.s32.totalorder %s19, 0
      %p52 = por %p50, %p51
      %p53 = scmp.ne.s32.totalorder %s39, %s40
      %p54 = scmp.eq.s32.totalorder %s20, 2
      %p55 = por %p53, %p54
      %p57 = scmp.ne.s32.totalorder %s40, %s56
      %p58 = scmp.eq.s32.totalorder %s20, 0
      %p59 = por %p57, %p58
      %s60 = ssub.s32 %s22, %s29
      %p61 = scmp.eq.s32.totalorder %s60, 0
      %s63 = sadd.s32 %s62, 1
      %s64 = scalar_select %p61, %s62, %s63
      %p67 = pneg %p61
      %p68 = scmp.eq.s32.totalorder %s14, 2
      %p69 = por %p67, %p68
      %p70 = scmp.ne.s32.totalorder %s62, %s65
      %p71 = scmp.eq.s32.totalorder %s14, 0
      %p72 = por %p70, %p71
      %p73 = scmp.ne.s32.totalorder %s62, %s65
      %p74 = scmp.eq.s32.totalorder %s19, 2
      %p75 = por %p73, %p74
      %p76 = scmp.ne.s32.totalorder %s65, %s66
      %p77 = scmp.eq.s32.totalorder %s19, 0
      %p78 = por %p76, %p77
      %p79 = scmp.ne.s32.totalorder %s65, %s66
      %p80 = scmp.eq.s32.totalorder %s20, 2
      %p81 = por %p79, %p80
      %p83 = scmp.ne.s32.totalorder %s66, %s82
      %p84 = scmp.eq.s32.totalorder %s20, 0
      %p85 = por %p83, %p84
      %s86 = ssub.s32 %s22, %s29
      %p87 = scmp.eq.s32.totalorder %s86, 0
      %s89 = sadd.s32 %s88, 1
      %s90 = scalar_select %p87, %s88, %s89
      %p93 = pneg %p87
      %p94 = scmp.eq.s32.totalorder %s14, 2
      %p95 = por %p93, %p94
      %p96 = scmp.ne.s32.totalorder %s88, %s91
      %p97 = scmp.eq.s32.totalorder %s14, 0
      %p98 = por %p96, %p97
      %p99 = scmp.ne.s32.totalorder %s88, %s91
      %p100 = scmp.eq.s32.totalorder %s19, 2
      %p101 = por %p99, %p100
      %p102 = scmp.ne.s32.totalorder %s91, %s92
      %p103 = scmp.eq.s32.totalorder %s19, 0
      %p104 = por %p102, %p103
      %p105 = scmp.ne.s32.totalorder %s91, %s92
      %p106 = scmp.eq.s32.totalorder %s20, 2
      %p107 = por %p105, %p106
      %p109 = scmp.ne.s32.totalorder %s92, %s108
      %p110 = scmp.eq.s32.totalorder %s20, 0
      %p111 = por %p109, %p110
      %s112 = ssub.s32 %s21, %s33
      %p113 = scmp.eq.s32.totalorder %s112, 0
      %s115 = sadd.s32 %s114, 1
      %s116 = scalar_select %p113, %s114, %s115
      %p119 = pneg %p113
      %p120 = scmp.eq.s32.totalorder %s14, 2
      %p121 = por %p119, %p120
      %p122 = scmp.ne.s32.totalorder %s114, %s117
      %p123 = scmp.eq.s32.totalorder %s14, 0
      %p124 = por %p122, %p123
      %p125 = scmp.ne.s32.totalorder %s114, %s117
      %p126 = scmp.eq.s32.totalorder %s19, 2
      %p127 = por %p125, %p126
      %p128 = scmp.ne.s32.totalorder %s117, %s118
      %p129 = scmp.eq.s32.totalorder %s19, 0
      %p130 = por %p128, %p129
      %p131 = scmp.ne.s32.totalorder %s117, %s118
      %p132 = scmp.eq.s32.totalorder %s20, 2
      %p133 = por %p131, %p132
      %p135 = scmp.ne.s32.totalorder %s118, %s134
      %p136 = scmp.eq.s32.totalorder %s20, 0
      %p137 = por %p135, %p136
      %p138 = scmp.le.s32.totalorder 1, %s14
      %p139 = scmp.lt.s32.totalorder %s14, 4
      %p140 = pnand %p138, %p139
      %p141 = pneg %p140
      // Predicated region
      $region9: #{feed_forward.1} parent=5 // pred_check
        _
      $region10: #{feed_forward.1} parent=5 // pred_check_branch
        %143 = sbr.rel (%p140) target = $region12
      $region11: #{feed_forward.1} parent=5 // pred_region
        %s144 = ssub.s32 %s14, 1
        // Predicated region
        $region13: #{feed_forward.1} parent=11 // pred_check
          %p145 = pneg %p52
        $region14: #{feed_forward.1} parent=11 // pred_check_branch
          %147 = sbr.rel (%p145) target = $region16
        $region15: #{feed_forward.1} parent=11 // pred_region
          %s148 = smul.u32 16, %s23
          %s150 = ssub.s32 2048, 2048
          %151 = vsyncadd [#allocation4], %s150
          %s152 = smul.addr %s148, 128
          %s153 = scalar_lea.hbm %s0, %s152
          %s154 = sshll.u32 [#allocation3], 4
          %s155 = int_to_ptr.vmem [resolvable:$true] %s154
          %160 = dma.hbm_to_vmem [thread:$0]  %s153, 2048, %s155, [#allocation4], 128, 128, 8
        $region16: #{feed_forward.1} parent=11 // pred_fallthru
          _
      $region12: #{feed_forward.1} parent=5 // pred_fallthru
        _
      %p161 = scmp.lt.s32.totalorder %s14, 3
      // Predicated region
      $region17: #{feed_forward.1} parent=5 // pred_check
        %p162 = pneg %p161
      $region18: #{feed_forward.1} parent=5 // pred_check_branch
        %164 = sbr.rel (%p162) target = $region20
      $region19: #{feed_forward.1} parent=5 // pred_region
        // Predicated region
        $region21: #{feed_forward.1} parent=19 // pred_check
          %p165 = pneg %p72
        $region22: #{feed_forward.1} parent=19 // pred_check_branch
          %167 = sbr.rel (%p165) target = $region24
        $region23: #{feed_forward.1} parent=19 // pred_region
          %s168 = sand.u32 %s14, 1
          %s169 = scalar_lea.sflag [#allocation7], %s168
          %s170 = sand.u32 %s62, 1
          %s171 = smul.addr %s170, 256
          %s172 = scalar_lea.vmem [#allocation6], %s171
          %s173 = smul.u32 2, %s22
          %s175 = ssub.s32 4096, 4096
          %176 = vsyncadd %s169, %s175
          %s177 = smul.addr %s173, 128
          %s178 = scalar_lea.hbm %s1, %s177
          %s179 = sshll.u32 %s172, 4
          %s180 = int_to_ptr.vmem [resolvable:$true] %s179
          %185 = dma.hbm_to_vmem [thread:$0]  %s178, 4096, %s180, %s169, 768, 256, 16
        $region24: #{feed_forward.1} parent=19 // pred_fallthru
          _
        // Predicated region
        $region25: #{feed_forward.1} parent=19 // pred_check
          %p186 = pneg %p98
        $region26: #{feed_forward.1} parent=19 // pred_check_branch
          %188 = sbr.rel (%p186) target = $region28
        $region27: #{feed_forward.1} parent=19 // pred_region
          %s189 = sand.u32 %s14, 1
          %s190 = scalar_lea.sflag [#allocation7], %s189
          %s191 = sand.u32 %s88, 1
          %s192 = smul.addr %s191, 128
          %s193 = scalar_lea.vmem [#allocation8], %s192
          %s194 = smul.u32 16, %s22
          %s196 = ssub.s32 2048, 2048
          %197 = vsyncadd %s190, %s196
          %s198 = smul.addr %s194, 128
          %s199 = scalar_lea.hbm %s2, %s198
          %s200 = sshll.u32 %s193, 4
          %s201 = int_to_ptr.vmem [resolvable:$true] %s200
          %206 = dma.hbm_to_vmem [thread:$0]  %s199, 2048, %s201, %s190, 128, 128, 8
        $region28: #{feed_forward.1} parent=19 // pred_fallthru
          _
      $region20: #{feed_forward.1} parent=5 // pred_fallthru
        _
      %p207 = scmp.le.s32.totalorder 1, %s14
      %p208 = scmp.lt.s32.totalorder %s14, 4
      %p209 = pnand %p207, %p208
      %p210 = pneg %p209
      // Predicated region
      $region29: #{feed_forward.1} parent=5 // pred_check
        _
      $region30: #{feed_forward.1} parent=5 // pred_check_branch
        %212 = sbr.rel (%p209) target = $region32
      $region31: #{feed_forward.1} parent=5 // pred_region
        %s213 = ssub.s32 %s14, 1
        // Predicated region
        $region33: #{feed_forward.1} parent=31 // pred_check
          %p214 = pneg %p52
        $region34: #{feed_forward.1} parent=31 // pred_check_branch
          %216 = sbr.rel (%p214) target = $region36
        $region35: #{feed_forward.1} parent=31 // pred_region
          %217 = dma.done [#allocation4], 2048
        $region36: #{feed_forward.1} parent=31 // pred_fallthru
          _
        %s218 = sand.u32 %s19, 1
        %s219 = scalar_lea.sflag [#allocation7], %s218
        %s220 = sand.u32 %s65, 1
        %s221 = smul.addr %s220, 256
        %s222 = scalar_lea.vmem [#allocation6], %s221
        // Predicated region
        $region37: #{feed_forward.1} parent=31 // pred_check
          %p223 = pneg %p78
        $region38: #{feed_forward.1} parent=31 // pred_check_branch
          %225 = sbr.rel (%p223) target = $region40
        $region39: #{feed_forward.1} parent=31 // pred_region
          %226 = dma.done %s219, 4096
        $region40: #{feed_forward.1} parent=31 // pred_fallthru
          _
        %s227 = sand.u32 %s19, 1
        %s228 = scalar_lea.sflag [#allocation7], %s227
        %s229 = sand.u32 %s91, 1
        %s230 = smul.addr %s229, 128
        %s231 = scalar_lea.vmem [#allocation8], %s230
        // Predicated region
        $region41: #{feed_forward.1} parent=31 // pred_check
          %p232 = pneg %p104
        $region42: #{feed_forward.1} parent=31 // pred_check_branch
          %234 = sbr.rel (%p232) target = $region44
        $region43: #{feed_forward.1} parent=31 // pred_region
          %235 = dma.done %s228, 2048
        $region44: #{feed_forward.1} parent=31 // pred_fallthru
          _
        %p236 = pneg %p52
        %p237 = pneg %p49
        %s238 = sand.u32 %s19, 1
        %s239 = scalar_lea.sflag [#allocation7], %s238
        %s240 = sand.u32 %s65, 1
        %s241 = smul.addr %s240, 256
        %s242 = scalar_lea.vmem [#allocation6], %s241
        %p243 = pneg %p78
        %p244 = pneg %p75
        %s245 = sand.u32 %s19, 1
        %s246 = scalar_lea.sflag [#allocation7], %s245
        %s247 = sand.u32 %s91, 1
        %s248 = smul.addr %s247, 128
        %s249 = scalar_lea.vmem [#allocation8], %s248
        %p250 = pneg %p104
        %p251 = pneg %p101
        %p252 = pneg %p130
        %p253 = pneg %p127
        %s254 = smul.u32 16, %s23
        %s255 = smul.u32 2, %s24
        %s256 = smul.u32 16, %s24
        %s257 = smul.u32 16, %s23
        %p258 = scmp.eq.s32.totalorder %s24, 0
        // Predicated region
        $region45: #{feed_forward.1} parent=31 // pred_check
          %p259 = pneg %p258
        $region46: #{feed_forward.1} parent=31 // pred_check_branch
          %261 = sbr.rel (%p259) target = $region48
        $region47: #{feed_forward.1} parent=31 // pred_region
          %262 = vst [vmem:[#allocation2] sm:$0xff] 0.0
          %263 = vst [vmem:[#allocation2 + $0x8] sm:$0xff] 0.0
          %264 = vst [vmem:[#allocation2 + $0x10] sm:$0xff] 0.0
          %265 = vst [vmem:[#allocation2 + $0x18] sm:$0xff] 0.0
          %266 = vst [vmem:[#allocation2 + $0x20] sm:$0xff] 0.0
          %267 = vst [vmem:[#allocation2 + $0x28] sm:$0xff] 0.0
          %268 = vst [vmem:[#allocation2 + $0x30] sm:$0xff] 0.0
          %269 = vst [vmem:[#allocation2 + $0x38] sm:$0xff] 0.0
          %270 = vst [vmem:[#allocation2 + $0x40] sm:$0xff] 0.0
          %271 = vst [vmem:[#allocation2 + $0x48] sm:$0xff] 0.0
          %272 = vst [vmem:[#allocation2 + $0x50] sm:$0xff] 0.0
          %273 = vst [vmem:[#allocation2 + $0x58] sm:$0xff] 0.0
          %274 = vst [vmem:[#allocation2 + $0x60] sm:$0xff] 0.0
          %275 = vst [vmem:[#allocation2 + $0x68] sm:$0xff] 0.0
          %276 = vst [vmem:[#allocation2 + $0x70] sm:$0xff] 0.0
          %277 = vst [vmem:[#allocation2 + $0x78] sm:$0xff] 0.0
        $region48: #{feed_forward.1} parent=31 // pred_fallthru
          _
        %v278 = vld [vmem:[#allocation3] sm:$0xff]
        %v279 = vld [vmem:[#allocation3 + $0x8] sm:$0xff]
        %v280 = vld [vmem:[#allocation3 + $0x10] sm:$0xff]
        %v281 = vld [vmem:[#allocation3 + $0x18] sm:$0xff]
        %v282 = vld [vmem:[#allocation3 + $0x20] sm:$0xff]
        %v283 = vld [vmem:[#allocation3 + $0x28] sm:$0xff]
        %v284 = vld [vmem:[#allocation3 + $0x30] sm:$0xff]
        %v285 = vld [vmem:[#allocation3 + $0x38] sm:$0xff]
        %v286 = vld [vmem:[#allocation3 + $0x40] sm:$0xff]
        %v287 = vld [vmem:[#allocation3 + $0x48] sm:$0xff]
        %v288 = vld [vmem:[#allocation3 + $0x50] sm:$0xff]
        %v289 = vld [vmem:[#allocation3 + $0x58] sm:$0xff]
        %v290 = vld [vmem:[#allocation3 + $0x60] sm:$0xff]
        %v291 = vld [vmem:[#allocation3 + $0x68] sm:$0xff]
        %v292 = vld [vmem:[#allocation3 + $0x70] sm:$0xff]
        %v293 = vld [vmem:[#allocation3 + $0x78] sm:$0xff]
        %v294 = vld [vmem:[%s222] sm:$0xff]
        %v295 = vld [vmem:[%s222 + $0x8] sm:$0xff]
        %v296 = vld [vmem:[%s222 + $0x10] sm:$0xff]
        %v297 = vld [vmem:[%s222 + $0x18] sm:$0xff]
        %v298 = vld [vmem:[%s222 + $0x20] sm:$0xff]
        %v299 = vld [vmem:[%s222 + $0x28] sm:$0xff]
        %v300 = vld [vmem:[%s222 + $0x30] sm:$0xff]
        %v301 = vld [vmem:[%s222 + $0x38] sm:$0xff]
        %v302 = vld [vmem:[%s222 + $0x40] sm:$0xff]
        %v303 = vld [vmem:[%s222 + $0x48] sm:$0xff]
        %v304 = vld [vmem:[%s222 + $0x50] sm:$0xff]
        %v305 = vld [vmem:[%s222 + $0x58] sm:$0xff]
        %v306 = vld [vmem:[%s222 + $0x60] sm:$0xff]
        %v307 = vld [vmem:[%s222 + $0x68] sm:$0xff]
        %v308 = vld [vmem:[%s222 + $0x70] sm:$0xff]
        %v309 = vld [vmem:[%s222 + $0x78] sm:$0xff]
        %v310 = vld [vmem:[%s222 + $0x80] sm:$0xff]
        %v311 = vld [vmem:[%s222 + $0x88] sm:$0xff]
        %v312 = vld [vmem:[%s222 + $0x90] sm:$0xff]
        %v313 = vld [vmem:[%s222 + $0x98] sm:$0xff]
        %v314 = vld [vmem:[%s222 + $0xa0] sm:$0xff]
        %v315 = vld [vmem:[%s222 + $0xa8] sm:$0xff]
        %v316 = vld [vmem:[%s222 + $0xb0] sm:$0xff]
        %v317 = vld [vmem:[%s222 + $0xb8] sm:$0xff]
        %v318 = vld [vmem:[%s222 + $0xc0] sm:$0xff]
        %v319 = vld [vmem:[%s222 + $0xc8] sm:$0xff]
        %v320 = vld [vmem:[%s222 + $0xd0] sm:$0xff]
        %v321 = vld [vmem:[%s222 + $0xd8] sm:$0xff]
        %v322 = vld [vmem:[%s222 + $0xe0] sm:$0xff]
        %v323 = vld [vmem:[%s222 + $0xe8] sm:$0xff]
        %v324 = vld [vmem:[%s222 + $0xf0] sm:$0xff]
        %v325 = vld [vmem:[%s222 + $0xf8] sm:$0xff]
        %326 = vmatprep.subr.mxu0 %v295
        %327 = vmatpush1.msra.mxu0 %v294
        %328 = vmatprep.subr.mxu0 %v297
        %329 = vmatpush1.msra.mxu0 %v296
        %330 = vmatprep.subr.mxu0 %v299
        %331 = vmatpush1.msra.mxu0 %v298
        %332 = vmatprep.subr.mxu0 %v301
        %333 = vmatpush1.msra.mxu0 %v300
        %334 = vmatprep.subr.mxu0 %v303
        %335 = vmatpush1.msra.mxu0 %v302
        %336 = vmatprep.subr.mxu0 %v305
        %337 = vmatpush1.msra.mxu0 %v304
        %338 = vmatprep.subr.mxu0 %v307
        %339 = vmatpush1.msra.mxu0 %v306
        %340 = vmatprep.subr.mxu0 %v309
        %341 = vmatpush1.msra.mxu0 %v308
        %342 = vmatprep.subr.mxu0 %v311
        %343 = vmatpush1.msra.mxu0 %v310
        %344 = vmatprep.subr.mxu0 %v313
        %345 = vmatpush1.msra.mxu0 %v312
        %346 = vmatprep.subr.mxu0 %v315
        %347 = vmatpush1.msra.mxu0 %v314
        %348 = vmatprep.subr.mxu0 %v317
        %349 = vmatpush1.msra.mxu0 %v316
        %350 = vmatprep.subr.mxu0 %v319
        %351 = vmatpush1.msra.mxu0 %v318
        %352 = vmatprep.subr.mxu0 %v321
        %353 = vmatpush1.msra.mxu0 %v320
        %354 = vmatprep.subr.mxu0 %v323
        %355 = vmatpush1.msra.mxu0 %v322
        %356 = vmatprep.subr.mxu0 %v325
        %357 = vmatpush1.msra.mxu0 %v324
        %358 = vmatprep.subr.mxu0 0.0
        %359 = vmatpush1.msra.mxu0 0.0
        %360 = vmatprep.subr.mxu0 0.0
        %361 = vmatpush1.msra.mxu0 0.0
        %362 = vmatprep.subr.mxu0 0.0
        %363 = vmatpush1.msra.mxu0 0.0
        %364 = vmatprep.subr.mxu0 0.0
        %365 = vmatpush1.msra.mxu0 0.0
        %366 = vmatprep.subr.mxu0 0.0
        %367 = vmatpush1.msra.mxu0 0.0
        %368 = vmatprep.subr.mxu0 0.0
        %369 = vmatpush1.msra.mxu0 0.0
        %370 = vmatprep.subr.mxu0 0.0
        %371 = vmatpush1.msra.mxu0 0.0
        %372 = vmatprep.subr.mxu0 0.0
        %373 = vmatpush1.msra.mxu0 0.0
        %374 = vmatprep.subr.mxu0 0.0
        %375 = vmatpush1.msra.mxu0 0.0
        %376 = vmatprep.subr.mxu0 0.0
        %377 = vmatpush1.msra.mxu0 0.0
        %378 = vmatprep.subr.mxu0 0.0
        %379 = vmatpush1.msra.mxu0 0.0
        %380 = vmatprep.subr.mxu0 0.0
        %381 = vmatpush1.msra.mxu0 0.0
        %382 = vmatprep.subr.mxu0 0.0
        %383 = vmatpush1.msra.mxu0 0.0
        %384 = vmatprep.subr.mxu0 0.0
        %385 = vmatpush1.msra.mxu0 0.0
        %386 = vmatprep.subr.mxu0 0.0
        %387 = vmatpush1.msra.mxu0 0.0
        %388 = vmatprep.subr.mxu0 0.0
        %389 = vmatpush1.msra.mxu0 0.0
        %390 = vmatprep.mubr.f32.mxu0 0.0
        %391 = vmatmul.mubr.f32.gmra.mrb[0].mxu0 %v278
        %v392 = vpop.f32.mrb[0].mxu0
        %v393 = vadd.f32 0.0, %v392
        %v394 = vpop.f32.mrb[0].mxu0
        %v395 = vadd.f32 0.0, %v394
        %396 = vmatprep.mubr.f32.mxu0 0.0
        %397 = vmatmul.mubr.f32.gmra.mrb[0].mxu0 %v279
        %v398 = vpop.f32.mrb[0].mxu0
        %v399 = vadd.f32 0.0, %v398
        %v400 = vpop.f32.mrb[0].mxu0
        %v401 = vadd.f32 0.0, %v400
        %402 = vmatprep.mubr.f32.mxu0 0.0
        %403 = vmatmul.mubr.f32.gmra.mrb[0].mxu0 %v280
        %v404 = vpop.f32.mrb[0].mxu0
        %v405 = vadd.f32 0.0, %v404
        %v406 = vpop.f32.mrb[0].mxu0
        %v407 = vadd.f32 0.0, %v406
        %408 = vmatprep.mubr.f32.mxu0 0.0
        %409 = vmatmul.mubr.f32.gmra.mrb[0].mxu0 %v281
        %v410 = vpop.f32.mrb[0].mxu0
        %v411 = vadd.f32 0.0, %v410
        %v412 = vpop.f32.mrb[0].mxu0
        %v413 = vadd.f32 0.0, %v412
        %414 = vmatprep.mubr.f32.mxu0 0.0
        %415 = vmatmul.mubr.f32.gmra.mrb[0].mxu0 %v282
        %v416 = vpop.f32.mrb[0].mxu0
        %v417 = vadd.f32 0.0, %v416
        %v418 = vpop.f32.mrb[0].mxu0
        %v419 = vadd.f32 0.0, %v418
        %420 = vmatprep.mubr.f32.mxu0 0.0
        %421 = vmatmul.mubr.f32.gmra.mrb[0].mxu0 %v283
        %v422 = vpop.f32.mrb[0].mxu0
        %v423 = vadd.f32 0.0, %v422
        %v424 = vpop.f32.mrb[0].mxu0
        %v425 = vadd.f32 0.0, %v424
        %426 = vmatprep.mubr.f32.mxu0 0.0
        %427 = vmatmul.mubr.f32.gmra.mrb[0].mxu0 %v284
        %v428 = vpop.f32.mrb[0].mxu0
        %v429 = vadd.f32 0.0, %v428
        %v430 = vpop.f32.mrb[0].mxu0
        %v431 = vadd.f32 0.0, %v430
        %432 = vmatprep.mubr.f32.mxu0 0.0
        %433 = vmatmul.mubr.f32.gmra.mrb[0].mxu0 %v285
        %v434 = vpop.f32.mrb[0].mxu0
        %v435 = vadd.f32 0.0, %v434
        %v436 = vpop.f32.mrb[0].mxu0
        %v437 = vadd.f32 0.0, %v436
        %438 = vmatprep.mubr.f32.mxu0 0.0
        %439 = vmatmul.mubr.f32.gmra.mrb[0].mxu0 %v286
        %v440 = vpop.f32.mrb[0].mxu0
        %v441 = vadd.f32 0.0, %v440
        %v442 = vpop.f32.mrb[0].mxu0
        %v443 = vadd.f32 0.0, %v442
        %444 = vmatprep.mubr.f32.mxu0 0.0
        %445 = vmatmul.mubr.f32.gmra.mrb[0].mxu0 %v287
        %v446 = vpop.f32.mrb[0].mxu0
        %v447 = vadd.f32 0.0, %v446
        %v448 = vpop.f32.mrb[0].mxu0
        %v449 = vadd.f32 0.0, %v448
        %450 = vmatprep.mubr.f32.mxu0 0.0
        %451 = vmatmul.mubr.f32.gmra.mrb[0].mxu0 %v288
        %v452 = vpop.f32.mrb[0].mxu0
        %v453 = vadd.f32 0.0, %v452
        %v454 = vpop.f32.mrb[0].mxu0
        %v455 = vadd.f32 0.0, %v454
        %456 = vmatprep.mubr.f32.mxu0 0.0
        %457 = vmatmul.mubr.f32.gmra.mrb[0].mxu0 %v289
        %v458 = vpop.f32.mrb[0].mxu0
        %v459 = vadd.f32 0.0, %v458
        %v460 = vpop.f32.mrb[0].mxu0
        %v461 = vadd.f32 0.0, %v460
        %462 = vmatprep.mubr.f32.mxu0 0.0
        %463 = vmatmul.mubr.f32.gmra.mrb[0].mxu0 %v290
        %v464 = vpop.f32.mrb[0].mxu0
        %v465 = vadd.f32 0.0, %v464
        %v466 = vpop.f32.mrb[0].mxu0
        %v467 = vadd.f32 0.0, %v466
        %468 = vmatprep.mubr.f32.mxu0 0.0
        %469 = vmatmul.mubr.f32.gmra.mrb[0].mxu0 %v291
        %v470 = vpop.f32.mrb[0].mxu0
        %v471 = vadd.f32 0.0, %v470
        %v472 = vpop.f32.mrb[0].mxu0
        %v473 = vadd.f32 0.0, %v472
        %474 = vmatprep.mubr.f32.mxu0 0.0
        %475 = vmatmul.mubr.f32.gmra.mrb[0].mxu0 %v292
        %v476 = vpop.f32.mrb[0].mxu0
        %v477 = vadd.f32 0.0, %v476
        %v478 = vpop.f32.mrb[0].mxu0
        %v479 = vadd.f32 0.0, %v478
        %480 = vmatprep.mubr.f32.mxu0 0.0
        %481 = vmatmul.mubr.f32.gmra.mrb[0].mxu0 %v293
        %v482 = vpop.f32.mrb[0].mxu0
        %v483 = vadd.f32 0.0, %v482
        %v484 = vpop.f32.mrb[0].mxu0
        %v485 = vadd.f32 0.0, %v484
        %486 = vdwg.mxu0
        %v487 = vxor.u32 %v393, 2147483648
        %v488 = vxor.u32 %v399, 2147483648
        %v489 = vxor.u32 %v405, 2147483648
        %v490 = vxor.u32 %v411, 2147483648
        %v491 = vxor.u32 %v417, 2147483648
        %v492 = vxor.u32 %v423, 2147483648
        %v493 = vxor.u32 %v429, 2147483648
        %v494 = vxor.u32 %v435, 2147483648
        %v495 = vxor.u32 %v441, 2147483648
        %v496 = vxor.u32 %v447, 2147483648
        %v497 = vxor.u32 %v453, 2147483648
        %v498 = vxor.u32 %v459, 2147483648
        %v499 = vxor.u32 %v465, 2147483648
        %v500 = vxor.u32 %v471, 2147483648
        %v501 = vxor.u32 %v477, 2147483648
        %v502 = vxor.u32 %v483, 2147483648
        %v503 = vmul.f32 %v487, 1.442695
        %v504 = vpow.pop %v503
        %v505 = vmul.f32 %v488, 1.442695
        %v506 = vpow.pop %v505
        %v507 = vmul.f32 %v489, 1.442695
        %v508 = vpow.pop %v507
        %v509 = vmul.f32 %v490, 1.442695
        %v510 = vpow.pop %v509
        %v511 = vmul.f32 %v491, 1.442695
        %v512 = vpow.pop %v511
        %v513 = vmul.f32 %v492, 1.442695
        %v514 = vpow.pop %v513
        %v515 = vmul.f32 %v493, 1.442695
        %v516 = vpow.pop %v515
        %v517 = vmul.f32 %v494, 1.442695
        %v518 = vpow.pop %v517
        %v519 = vmul.f32 %v495, 1.442695
        %v520 = vpow.pop %v519
        %v521 = vmul.f32 %v496, 1.442695
        %v522 = vpow.pop %v521
        %v523 = vmul.f32 %v497, 1.442695
        %v524 = vpow.pop %v523
        %v525 = vmul.f32 %v498, 1.442695
        %v526 = vpow.pop %v525
        %v527 = vmul.f32 %v499, 1.442695
        %v528 = vpow.pop %v527
        %v529 = vmul.f32 %v500, 1.442695
        %v530 = vpow.pop %v529
        %v531 = vmul.f32 %v501, 1.442695
        %v532 = vpow.pop %v531
        %v533 = vmul.f32 %v502, 1.442695
        %v534 = vpow.pop %v533
        %v535 = vadd.f32 %v504, 1.0
        %v536 = vadd.f32 %v506, 1.0
        %v537 = vadd.f32 %v508, 1.0
        %v538 = vadd.f32 %v510, 1.0
        %v539 = vadd.f32 %v512, 1.0
        %v540 = vadd.f32 %v514, 1.0
        %v541 = vadd.f32 %v516, 1.0
        %v542 = vadd.f32 %v518, 1.0
        %v543 = vadd.f32 %v520, 1.0
        %v544 = vadd.f32 %v522, 1.0
        %v545 = vadd.f32 %v524, 1.0
        %v546 = vadd.f32 %v526, 1.0
        %v547 = vadd.f32 %v528, 1.0
        %v548 = vadd.f32 %v530, 1.0
        %v549 = vadd.f32 %v532, 1.0
        %v550 = vadd.f32 %v534, 1.0
        %v551 = vrcp.pop %v535
        %v552 = vmul.f32 1.0, %v551
        %v553 = vrcp.pop %v536
        %v554 = vmul.f32 1.0, %v553
        %v555 = vrcp.pop %v537
        %v556 = vmul.f32 1.0, %v555
        %v557 = vrcp.pop %v538
        %v558 = vmul.f32 1.0, %v557
        %v559 = vrcp.pop %v539
        %v560 = vmul.f32 1.0, %v559
        %v561 = vrcp.pop %v540
        %v562 = vmul.f32 1.0, %v561
        %v563 = vrcp.pop %v541
        %v564 = vmul.f32 1.0, %v563
        %v565 = vrcp.pop %v542
        %v566 = vmul.f32 1.0, %v565
        %v567 = vrcp.pop %v543
        %v568 = vmul.f32 1.0, %v567
        %v569 = vrcp.pop %v544
        %v570 = vmul.f32 1.0, %v569
        %v571 = vrcp.pop %v545
        %v572 = vmul.f32 1.0, %v571
        %v573 = vrcp.pop %v546
        %v574 = vmul.f32 1.0, %v573
        %v575 = vrcp.pop %v547
        %v576 = vmul.f32 1.0, %v575
        %v577 = vrcp.pop %v548
        %v578 = vmul.f32 1.0, %v577
        %v579 = vrcp.pop %v549
        %v580 = vmul.f32 1.0, %v579
        %v581 = vrcp.pop %v550
        %v582 = vmul.f32 1.0, %v581
        %v583 = vmul.f32 %v393, %v552
        %v584 = vmul.f32 %v399, %v554
        %v585 = vmul.f32 %v405, %v556
        %v586 = vmul.f32 %v411, %v558
        %v587 = vmul.f32 %v417, %v560
        %v588 = vmul.f32 %v423, %v562
        %v589 = vmul.f32 %v429, %v564
        %v590 = vmul.f32 %v435, %v566
        %v591 = vmul.f32 %v441, %v568
        %v592 = vmul.f32 %v447, %v570
        %v593 = vmul.f32 %v453, %v572
        %v594 = vmul.f32 %v459, %v574
        %v595 = vmul.f32 %v465, %v576
        %v596 = vmul.f32 %v471, %v578
        %v597 = vmul.f32 %v477, %v580
        %v598 = vmul.f32 %v483, %v582
        %v599 = vmul.f32 %v583, %v395
        %v600 = vmul.f32 %v584, %v401
        %v601 = vmul.f32 %v585, %v407
        %v602 = vmul.f32 %v586, %v413
        %v603 = vmul.f32 %v587, %v419
        %v604 = vmul.f32 %v588, %v425
        %v605 = vmul.f32 %v589, %v431
        %v606 = vmul.f32 %v590, %v437
        %v607 = vmul.f32 %v591, %v443
        %v608 = vmul.f32 %v592, %v449
        %v609 = vmul.f32 %v593, %v455
        %v610 = vmul.f32 %v594, %v461
        %v611 = vmul.f32 %v595, %v467
        %v612 = vmul.f32 %v596, %v473
        %v613 = vmul.f32 %v597, %v479
        %v614 = vmul.f32 %v598, %v485
        %v615 = vld [vmem:[#allocation2] sm:$0xff]
        %v616 = vld [vmem:[#allocation2 + $0x8] sm:$0xff]
        %v617 = vld [vmem:[#allocation2 + $0x10] sm:$0xff]
        %v618 = vld [vmem:[#allocation2 + $0x18] sm:$0xff]
        %v619 = vld [vmem:[#allocation2 + $0x20] sm:$0xff]
        %v620 = vld [vmem:[#allocation2 + $0x28] sm:$0xff]
        %v621 = vld [vmem:[#allocation2 + $0x30] sm:$0xff]
        %v622 = vld [vmem:[#allocation2 + $0x38] sm:$0xff]
        %v623 = vld [vmem:[#allocation2 + $0x40] sm:$0xff]
        %v624 = vld [vmem:[#allocation2 + $0x48] sm:$0xff]
        %v625 = vld [vmem:[#allocation2 + $0x50] sm:$0xff]
        %v626 = vld [vmem:[#allocation2 + $0x58] sm:$0xff]
        %v627 = vld [vmem:[#allocation2 + $0x60] sm:$0xff]
        %v628 = vld [vmem:[#allocation2 + $0x68] sm:$0xff]
        %v629 = vld [vmem:[#allocation2 + $0x70] sm:$0xff]
        %v630 = vld [vmem:[#allocation2 + $0x78] sm:$0xff]
        %v631 = vld [vmem:[%s231] sm:$0xff]
        %v632 = vld [vmem:[%s231 + $0x8] sm:$0xff]
        %v633 = vld [vmem:[%s231 + $0x10] sm:$0xff]
        %v634 = vld [vmem:[%s231 + $0x18] sm:$0xff]
        %v635 = vld [vmem:[%s231 + $0x20] sm:$0xff]
        %v636 = vld [vmem:[%s231 + $0x28] sm:$0xff]
        %v637 = vld [vmem:[%s231 + $0x30] sm:$0xff]
        %v638 = vld [vmem:[%s231 + $0x38] sm:$0xff]
        %v639 = vld [vmem:[%s231 + $0x40] sm:$0xff]
        %v640 = vld [vmem:[%s231 + $0x48] sm:$0xff]
        %v641 = vld [vmem:[%s231 + $0x50] sm:$0xff]
        %v642 = vld [vmem:[%s231 + $0x58] sm:$0xff]
        %v643 = vld [vmem:[%s231 + $0x60] sm:$0xff]
        %v644 = vld [vmem:[%s231 + $0x68] sm:$0xff]
        %v645 = vld [vmem:[%s231 + $0x70] sm:$0xff]
        %v646 = vld [vmem:[%s231 + $0x78] sm:$0xff]
        %647 = vmatprep.subr.mxu0 0.0
        %648 = vmatpush1.msra.mxu0 %v631
        %649 = vmatprep.subr.mxu0 0.0
        %650 = vmatpush1.msra.mxu0 %v632
        %651 = vmatprep.subr.mxu0 0.0
        %652 = vmatpush1.msra.mxu0 %v633
        %653 = vmatprep.subr.mxu0 0.0
        %654 = vmatpush1.msra.mxu0 %v634
        %655 = vmatprep.subr.mxu0 0.0
        %656 = vmatpush1.msra.mxu0 %v635
        %657 = vmatprep.subr.mxu0 0.0
        %658 = vmatpush1.msra.mxu0 %v636
        %659 = vmatprep.subr.mxu0 0.0
        %660 = vmatpush1.msra.mxu0 %v637
        %661 = vmatprep.subr.mxu0 0.0
        %662 = vmatpush1.msra.mxu0 %v638
        %663 = vmatprep.subr.mxu0 0.0
        %664 = vmatpush1.msra.mxu0 %v639
        %665 = vmatprep.subr.mxu0 0.0
        %666 = vmatpush1.msra.mxu0 %v640
        %667 = vmatprep.subr.mxu0 0.0
        %668 = vmatpush1.msra.mxu0 %v641
        %669 = vmatprep.subr.mxu0 0.0
        %670 = vmatpush1.msra.mxu0 %v642
        %671 = vmatprep.subr.mxu0 0.0
        %672 = vmatpush1.msra.mxu0 %v643
        %673 = vmatprep.subr.mxu0 0.0
        %674 = vmatpush1.msra.mxu0 %v644
        %675 = vmatprep.subr.mxu0 0.0
        %676 = vmatpush1.msra.mxu0 %v645
        %677 = vmatprep.subr.mxu0 0.0
        %678 = vmatpush1.msra.mxu0 %v646
        %679 = vmatprep.subr.mxu0 0.0
        %680 = vmatpush1.msra.mxu0 0.0
        %681 = vmatprep.subr.mxu0 0.0
        %682 = vmatpush1.msra.mxu0 0.0
        %683 = vmatprep.subr.mxu0 0.0
        %684 = vmatpush1.msra.mxu0 0.0
        %685 = vmatprep.subr.mxu0 0.0
        %686 = vmatpush1.msra.mxu0 0.0
        %687 = vmatprep.subr.mxu0 0.0
        %688 = vmatpush1.msra.mxu0 0.0
        %689 = vmatprep.subr.mxu0 0.0
        %690 = vmatpush1.msra.mxu0 0.0
        %691 = vmatprep.subr.mxu0 0.0
        %692 = vmatpush1.msra.mxu0 0.0
        %693 = vmatprep.subr.mxu0 0.0
        %694 = vmatpush1.msra.mxu0 0.0
        %695 = vmatprep.subr.mxu0 0.0
        %696 = vmatpush1.msra.mxu0 0.0
        %697 = vmatprep.subr.mxu0 0.0
        %698 = vmatpush1.msra.mxu0 0.0
        %699 = vmatprep.subr.mxu0 0.0
        %700 = vmatpush1.msra.mxu0 0.0
        %701 = vmatprep.subr.mxu0 0.0
        %702 = vmatpush1.msra.mxu0 0.0
        %703 = vmatprep.subr.mxu0 0.0
        %704 = vmatpush1.msra.mxu0 0.0
        %705 = vmatprep.subr.mxu0 0.0
        %706 = vmatpush1.msra.mxu0 0.0
        %707 = vmatprep.subr.mxu0 0.0
        %708 = vmatpush1.msra.mxu0 0.0
        %709 = vmatprep.subr.mxu0 0.0
        %710 = vmatpush1.msra.mxu0 0.0
        %711 = vmatprep.mubr.f32.mxu0 0.0
        %712 = vmatmul.mubr.f32.gmra.mrb[0].mxu0 %v599
        %v713 = vpop.f32.mrb[0].mxu0
        %v714 = vadd.f32 0.0, %v713
        %v715 = vpop.f32.mrb[0].mxu0
        %716 = vmatprep.mubr.f32.mxu0 0.0
        %717 = vmatmul.mubr.f32.gmra.mrb[0].mxu0 %v600
        %v718 = vpop.f32.mrb[0].mxu0
        %v719 = vadd.f32 0.0, %v718
        %v720 = vpop.f32.mrb[0].mxu0
        %721 = vmatprep.mubr.f32.mxu0 0.0
        %722 = vmatmul.mubr.f32.gmra.mrb[0].mxu0 %v601
        %v723 = vpop.f32.mrb[0].mxu0
        %v724 = vadd.f32 0.0, %v723
        %v725 = vpop.f32.mrb[0].mxu0
        %726 = vmatprep.mubr.f32.mxu0 0.0
        %727 = vmatmul.mubr.f32.gmra.mrb[0].mxu0 %v602
        %v728 = vpop.f32.mrb[0].mxu0
        %v729 = vadd.f32 0.0, %v728
        %v730 = vpop.f32.mrb[0].mxu0
        %731 = vmatprep.mubr.f32.mxu0 0.0
        %732 = vmatmul.mubr.f32.gmra.mrb[0].mxu0 %v603
        %v733 = vpop.f32.mrb[0].mxu0
        %v734 = vadd.f32 0.0, %v733
        %v735 = vpop.f32.mrb[0].mxu0
        %736 = vmatprep.mubr.f32.mxu0 0.0
        %737 = vmatmul.mubr.f32.gmra.mrb[0].mxu0 %v604
        %v738 = vpop.f32.mrb[0].mxu0
        %v739 = vadd.f32 0.0, %v738
        %v740 = vpop.f32.mrb[0].mxu0
        %741 = vmatprep.mubr.f32.mxu0 0.0
        %742 = vmatmul.mubr.f32.gmra.mrb[0].mxu0 %v605
        %v743 = vpop.f32.mrb[0].mxu0
        %v744 = vadd.f32 0.0, %v743
        %v745 = vpop.f32.mrb[0].mxu0
        %746 = vmatprep.mubr.f32.mxu0 0.0
        %747 = vmatmul.mubr.f32.gmra.mrb[0].mxu0 %v606
        %v748 = vpop.f32.mrb[0].mxu0
        %v749 = vadd.f32 0.0, %v748
        %v750 = vpop.f32.mrb[0].mxu0
        %751 = vmatprep.mubr.f32.mxu0 0.0
        %752 = vmatmul.mubr.f32.gmra.mrb[0].mxu0 %v607
        %v753 = vpop.f32.mrb[0].mxu0
        %v754 = vadd.f32 0.0, %v753
        %v755 = vpop.f32.mrb[0].mxu0
        %756 = vmatprep.mubr.f32.mxu0 0.0
        %757 = vmatmul.mubr.f32.gmra.mrb[0].mxu0 %v608
        %v758 = vpop.f32.mrb[0].mxu0
        %v759 = vadd.f32 0.0, %v758
        %v760 = vpop.f32.mrb[0].mxu0
        %761 = vmatprep.mubr.f32.mxu0 0.0
        %762 = vmatmul.mubr.f32.gmra.mrb[0].mxu0 %v609
        %v763 = vpop.f32.mrb[0].mxu0
        %v764 = vadd.f32 0.0, %v763
        %v765 = vpop.f32.mrb[0].mxu0
        %766 = vmatprep.mubr.f32.mxu0 0.0
        %767 = vmatmul.mubr.f32.gmra.mrb[0].mxu0 %v610
        %v768 = vpop.f32.mrb[0].mxu0
        %v769 = vadd.f32 0.0, %v768
        %v770 = vpop.f32.mrb[0].mxu0
        %771 = vmatprep.mubr.f32.mxu0 0.0
        %772 = vmatmul.mubr.f32.gmra.mrb[0].mxu0 %v611
        %v773 = vpop.f32.mrb[0].mxu0
        %v774 = vadd.f32 0.0, %v773
        %v775 = vpop.f32.mrb[0].mxu0
        %776 = vmatprep.mubr.f32.mxu0 0.0
        %777 = vmatmul.mubr.f32.gmra.mrb[0].mxu0 %v612
        %v778 = vpop.f32.mrb[0].mxu0
        %v779 = vadd.f32 0.0, %v778
        %v780 = vpop.f32.mrb[0].mxu0
        %781 = vmatprep.mubr.f32.mxu0 0.0
        %782 = vmatmul.mubr.f32.gmra.mrb[0].mxu0 %v613
        %v783 = vpop.f32.mrb[0].mxu0
        %v784 = vadd.f32 0.0, %v783
        %v785 = vpop.f32.mrb[0].mxu0
        %786 = vmatprep.mubr.f32.mxu0 0.0
        %787 = vmatmul.mubr.f32.gmra.mrb[0].mxu0 %v614
        %v788 = vpop.f32.mrb[0].mxu0
        %v789 = vadd.f32 0.0, %v788
        %v790 = vpop.f32.mrb[0].mxu0
        %791 = vdwg.mxu0
        %v792 = vadd.f32 %v615, %v714
        %v793 = vadd.f32 %v616, %v719
        %v794 = vadd.f32 %v617, %v724
        %v795 = vadd.f32 %v618, %v729
        %v796 = vadd.f32 %v619, %v734
        %v797 = vadd.f32 %v620, %v739
        %v798 = vadd.f32 %v621, %v744
        %v799 = vadd.f32 %v622, %v749
        %v800 = vadd.f32 %v623, %v754
        %v801 = vadd.f32 %v624, %v759
        %v802 = vadd.f32 %v625, %v764
        %v803 = vadd.f32 %v626, %v769
        %v804 = vadd.f32 %v627, %v774
        %v805 = vadd.f32 %v628, %v779
        %v806 = vadd.f32 %v629, %v784
        %v807 = vadd.f32 %v630, %v789
        %808 = vst [vmem:[#allocation2] sm:$0xff] %v792
        %809 = vst [vmem:[#allocation2 + $0x8] sm:$0xff] %v793
        %810 = vst [vmem:[#allocation2 + $0x10] sm:$0xff] %v794
        %811 = vst [vmem:[#allocation2 + $0x18] sm:$0xff] %v795
        %812 = vst [vmem:[#allocation2 + $0x20] sm:$0xff] %v796
        %813 = vst [vmem:[#allocation2 + $0x28] sm:$0xff] %v797
        %814 = vst [vmem:[#allocation2 + $0x30] sm:$0xff] %v798
        %815 = vst [vmem:[#allocation2 + $0x38] sm:$0xff] %v799
        %816 = vst [vmem:[#allocation2 + $0x40] sm:$0xff] %v800
        %817 = vst [vmem:[#allocation2 + $0x48] sm:$0xff] %v801
        %818 = vst [vmem:[#allocation2 + $0x50] sm:$0xff] %v802
        %819 = vst [vmem:[#allocation2 + $0x58] sm:$0xff] %v803
        %820 = vst [vmem:[#allocation2 + $0x60] sm:$0xff] %v804
        %821 = vst [vmem:[#allocation2 + $0x68] sm:$0xff] %v805
        %822 = vst [vmem:[#allocation2 + $0x70] sm:$0xff] %v806
        %823 = vst [vmem:[#allocation2 + $0x78] sm:$0xff] %v807
        %p824 = scmp.eq.s32.totalorder %s24, 2
        // Predicated region
        $region49: #{feed_forward.1} parent=31 // pred_check
          %p825 = pneg %p824
        $region50: #{feed_forward.1} parent=31 // pred_check_branch
          %827 = sbr.rel (%p825) target = $region52
        $region51: #{feed_forward.1} parent=31 // pred_region
          %v828 = vld [vmem:[#allocation2] sm:$0xff]
          %v829 = vld [vmem:[#allocation2 + $0x8] sm:$0xff]
          %v830 = vld [vmem:[#allocation2 + $0x10] sm:$0xff]
          %v831 = vld [vmem:[#allocation2 + $0x18] sm:$0xff]
          %v832 = vld [vmem:[#allocation2 + $0x20] sm:$0xff]
          %v833 = vld [vmem:[#allocation2 + $0x28] sm:$0xff]
          %v834 = vld [vmem:[#allocation2 + $0x30] sm:$0xff]
          %v835 = vld [vmem:[#allocation2 + $0x38] sm:$0xff]
          %v836 = vld [vmem:[#allocation2 + $0x40] sm:$0xff]
          %v837 = vld [vmem:[#allocation2 + $0x48] sm:$0xff]
          %v838 = vld [vmem:[#allocation2 + $0x50] sm:$0xff]
          %v839 = vld [vmem:[#allocation2 + $0x58] sm:$0xff]
          %v840 = vld [vmem:[#allocation2 + $0x60] sm:$0xff]
          %v841 = vld [vmem:[#allocation2 + $0x68] sm:$0xff]
          %v842 = vld [vmem:[#allocation2 + $0x70] sm:$0xff]
          %v843 = vld [vmem:[#allocation2 + $0x78] sm:$0xff]
          %844 = vst [vmem:[#allocation9] sm:$0xff] %v828
          %845 = vst [vmem:[#allocation9 + $0x8] sm:$0xff] %v829
          %846 = vst [vmem:[#allocation9 + $0x10] sm:$0xff] %v830
          %847 = vst [vmem:[#allocation9 + $0x18] sm:$0xff] %v831
          %848 = vst [vmem:[#allocation9 + $0x20] sm:$0xff] %v832
          %849 = vst [vmem:[#allocation9 + $0x28] sm:$0xff] %v833
          %850 = vst [vmem:[#allocation9 + $0x30] sm:$0xff] %v834
          %851 = vst [vmem:[#allocation9 + $0x38] sm:$0xff] %v835
          %852 = vst [vmem:[#allocation9 + $0x40] sm:$0xff] %v836
          %853 = vst [vmem:[#allocation9 + $0x48] sm:$0xff] %v837
          %854 = vst [vmem:[#allocation9 + $0x50] sm:$0xff] %v838
          %855 = vst [vmem:[#allocation9 + $0x58] sm:$0xff] %v839
          %856 = vst [vmem:[#allocation9 + $0x60] sm:$0xff] %v840
          %857 = vst [vmem:[#allocation9 + $0x68] sm:$0xff] %v841
          %858 = vst [vmem:[#allocation9 + $0x70] sm:$0xff] %v842
          %859 = vst [vmem:[#allocation9 + $0x78] sm:$0xff] %v843
        $region52: #{feed_forward.1} parent=31 // pred_fallthru
          _
        // Predicated region
        $region53: #{feed_forward.1} parent=31 // pred_check
          %p860 = pneg %p127
        $region54: #{feed_forward.1} parent=31 // pred_check_branch
          %862 = sbr.rel (%p860) target = $region56
        $region55: #{feed_forward.1} parent=31 // pred_region
          %s863 = smul.u32 16, %s23
          %s865 = ssub.s32 2048, 2048
          %866 = vsyncadd [#allocation5], %s865
          %s867 = smul.addr %s863, 128
          %s868 = scalar_lea.hbm %s3, %s867
          %s869 = sshll.u32 [#allocation9], 4
          %s870 = int_to_ptr.vmem [resolvable:$true] %s869
          %875 = dma.vmem_to_hbm [thread:$0]  %s870, 2048, %s868, [#allocation5], 128, 128, 8
        $region56: #{feed_forward.1} parent=31 // pred_fallthru
          _
        // Predicated region
        $region57: #{feed_forward.1} parent=31 // pred_check
          %p876 = pneg %p127
        $region58: #{feed_forward.1} parent=31 // pred_check_branch
          %878 = sbr.rel (%p876) target = $region60
        $region59: #{feed_forward.1} parent=31 // pred_region
          %879 = dma.done [#allocation5], 2048
        $region60: #{feed_forward.1} parent=31 // pred_fallthru
          _
      $region32: #{feed_forward.1} parent=5 // pred_fallthru
        _
      %p880 = scmp.le.s32.totalorder 2, %s14
      // Predicated region
      $region61: #{feed_forward.1} parent=5 // pred_check
        %p881 = pneg %p880
      $region62: #{feed_forward.1} parent=5 // pred_check_branch
        %883 = sbr.rel (%p881) target = $region64
      $region63: #{feed_forward.1} parent=5 // pred_region
        %s884 = ssub.s32 %s14, 2
      $region64: #{feed_forward.1} parent=5 // pred_fallthru
        _
    $region6: #{feed_forward.1} parent=1 // loop_footer
      %s18 = sadd.s32 1, %s14
    $region7: #{feed_forward.1} parent=1 // loop_footer_branch
      %13 = sbr.rel target = $region3
    $region8: #{feed_forward.1} parent=1 // loop_exit
      _
    %885 = vsyncpa [#allocation4], 1
    %s886 = scalar_lea.sflag [#allocation4], 1
    %887 = vsyncpa %s886, 1
    %888 = vsyncpa [#allocation7], 1
    %s889 = scalar_lea.sflag [#allocation7], 1
    %890 = vsyncpa %s889, 1
    %891 = vsyncpa [#allocation5], 1
    %s892 = scalar_lea.sflag [#allocation5], 1
    %893 = vsyncpa %s892, 1

</llo_original>
